<compile_context>
chip_gen: v7x
topology: tpu7x:2x2x1
jax: 0.10.0
libtpu: 0.0.40
codegen_flags: <defaults>
</compile_context>

<pallas_src>
import jax
import jax.numpy as jnp
from jax.experimental import pallas as pl
from jax.experimental.pallas import tpu as pltpu


def _rope_kernel(x_ref, cos_ref, sin_ref, o_ref):
    """x_ref / o_ref: (tile_s, H, D) in x dtype; cos_ref / sin_ref: (tile_s, D) float32.

    out = x * cos_rep + partner * sin_signed, where partner[j] = x[j+1] on even lanes and
    x[j-1] on odd lanes (lane rolls + parity select); no strided/de-interleaving loads.
    """
    x = x_ref[...].astype(jnp.float32)                 # (tile_s, H, D)
    lane_axis = x.ndim - 1                             # non-negative axis (fixes previous error)
    # Static-shift rolls -> lane slices + concatenate (Mosaic-supported, interpret-safe).
    x_next = jnp.roll(x, -1, axis=lane_axis)           # x[..., j+1]: partner for even lanes
    x_prev = jnp.roll(x, 1, axis=lane_axis)            # x[..., j-1]: partner for odd lanes
    lane = jax.lax.broadcasted_iota(jnp.int32, x.shape, dimension=lane_axis)
    partner = jnp.where(lane % 2 == 0, x_next, x_prev)
    # Tables are per seq position only; broadcast across heads (sublane broadcast).
    cos = cos_ref[...][:, None, :]                     # (tile_s, 1, D)
    sin = sin_ref[...][:, None, :]                     # signed: -sin on even lanes, +sin on odd
    o_ref[...] = (x * cos + partner * sin).astype(o_ref.dtype)


def _rope_tables(positions, head_dim, base):
    """positions: (seq,) f32 -> cos_rep (seq, D) and signed sin (seq, D), f32, NOT head-repeated."""
    theta = 1.0 / (base ** (jnp.arange(0, head_dim, 2, dtype=jnp.float32) / head_dim))
    ang = positions[:, None] * theta[None, :]                      # (seq, D/2)
    cos = jnp.cos(ang)
    sin = jnp.sin(ang)
    cos_rep = jnp.repeat(cos, 2, axis=-1)                          # cos at lanes 2i and 2i+1
    sin_signed = jnp.stack([-sin, sin], axis=-1).reshape(positions.shape[0], head_dim)
    return cos_rep, sin_signed


def _choose_tile_s(seq, num_heads, head_dim, itemsize, budget_bytes, batch):
    """Largest seq tile whose double-buffered blocks + in-kernel f32 temps fit the VMEM budget."""
    if seq <= 8:
        return seq                                      # full-extent block (satisfies (8,128) rule)
    pack = 8 * max(1, 4 // itemsize)                    # sublanes per packed tile: f32 8, bf16 16, i8 32
    h_x = -(-num_heads // pack) * pack                  # padded head extent of the x / out blocks
    h_f = -(-num_heads // 8) * 8                        # padded head extent of the f32 temporaries
    per_s = (
        4 * h_x * head_dim * itemsize                   # x in + out blocks, double-buffered
        + 4 * head_dim * 4                              # cos + sin tables (f32), double-buffered
        + 5 * h_f * head_dim * 4                        # in-kernel f32 temps: x, 2 rolls, partner, out
    )
    tile_s = max(8, (budget_bytes // per_s) // 8 * 8)   # multiple of 8 (table block sublane rule)
    tile_s = min(tile_s, 2048, -(-seq // 8) * 8)
    # v7x has 2 TensorCores: make sure a 'parallel' axis gets >=2 grid steps when possible.
    if batch < 2 and -(-seq // tile_s) < 2:
        half = -(-((seq + 1) // 2) // 8) * 8
        if half >= 8:
            tile_s = half
    return tile_s


def rotary_positional_embedding(x, st_pos, *, total_seq_len, base=10000,
                                vmem_block_budget_bytes=None):
    """Apply interleaved RoPE. x: (batch, seq, num_heads, head_dim); st_pos: int or traced scalar."""
    batch, seq, num_heads, head_dim = x.shape
    assert head_dim % 2 == 0, "head_dim must be even"
    if isinstance(st_pos, int):
        assert 0 <= st_pos and st_pos + seq <= total_seq_len, "positions out of range"
    # TODO(synk): if head_dim < 128, fold pairs of heads into the lane dim for lane-dense stores.

    positions = jnp.arange(seq, dtype=jnp.float32) + jnp.asarray(st_pos, jnp.float32)
    cos_t, sin_t = _rope_tables(positions, head_dim, base)          # (seq, head_dim) each, f32

    # Generation-aware VMEM budgeting (v7x: 64 MiB/TC; v5e/v6e: 128 MiB).
    try:
        vmem_cap = int(pltpu.get_tpu_info().vmem_capacity_bytes)
    except Exception:
        vmem_cap = 128 << 20
    if vmem_block_budget_bytes is None:
        vmem_block_budget_bytes = min(12 << 20, vmem_cap // 8)
    vmem_limit_bytes = int(min(vmem_cap // 2, max(32 << 20, 3 * vmem_block_budget_bytes)))

    tile_s = _choose_tile_s(seq, num_heads, head_dim, x.dtype.itemsize,
                            vmem_block_budget_bytes, batch)
    # Batch innermost -> the table blocks keep the same block index across the batch sweep and are
    # DMA'd only once per seq tile.
    grid = (pl.cdiv(seq, tile_s), batch)

    out = pl.pallas_call(
        _rope_kernel,
        out_shape=jax.ShapeDtypeStruct(x.shape, x.dtype),
        grid_spec=pltpu.PrefetchScalarGridSpec(
            num_scalar_prefetch=0,
            grid=grid,
            in_specs=[
                pl.BlockSpec((None, tile_s, num_heads, head_dim),
                             lambda s, b: (b, s, 0, 0)),            # x (lane-dense head_dim)
                pl.BlockSpec((tile_s, head_dim), lambda s, b: (s, 0)),   # cos (per seq pos only)
                pl.BlockSpec((tile_s, head_dim), lambda s, b: (s, 0)),   # signed sin
            ],
            out_specs=pl.BlockSpec((None, tile_s, num_heads, head_dim),
                                   lambda s, b: (b, s, 0, 0)),
        ),
        compiler_params=pltpu.CompilerParams(
            dimension_semantics=("parallel", "parallel"),
            vmem_limit_bytes=vmem_limit_bytes,
        ),
    )(x, cos_t, sin_t)
    return out


def rope_ref(x, st_pos, total_seq_len, base=10000):
    """Pure-JAX reference mirroring the torch forward."""
    _, seq, _, head_dim = x.shape
    theta = 1.0 / (base ** (jnp.arange(0, head_dim, 2, dtype=jnp.float32) / head_dim))
    pos = jnp.arange(0, total_seq_len, dtype=jnp.float32)[:, None]
    ang = (pos * theta[None, :])[st_pos:st_pos + seq]               # (seq, head_dim/2)
    sin = jnp.sin(ang)[None, :, None, :]
    cos = jnp.cos(ang)[None, :, None, :]
    xe = x[..., 0::2].astype(jnp.float32)
    xo = x[..., 1::2].astype(jnp.float32)
    oe = xe * cos - xo * sin
    oo = xe * sin + xo * cos
    return jnp.stack([oe, oo], axis=-1).reshape(x.shape).astype(x.dtype)


if __name__ == "__main__":
    key = jax.random.PRNGKey(0)
    # Small shapes consistent with the module: batch=2, seq tokens=8, 4 heads,
    # head_dim=128 (d_model=512 // 4) -> lane-dense last dim; total cached seq_len=16.
    batch, seq, num_heads, head_dim = 2, 8, 4, 128
    total_seq_len = 16
    st_pos = 4

    x = jax.random.normal(key, (batch, seq, num_heads, head_dim), dtype=jnp.float32)

    y = rotary_positional_embedding(x, st_pos, total_seq_len=total_seq_len)
    y = jax.block_until_ready(y)

    y_ref = rope_ref(x, st_pos, total_seq_len)
    assert y.shape == x.shape
    assert y.dtype == x.dtype
    assert jnp.allclose(y, y_ref, atol=1e-5, rtol=1e-5)

    print("KERNEL_OK")
</pallas_src>

<mosaic_0001>
module attributes {stable_mosaic.version = 11 : i64} {
  func.func @_rope_kernel(%arg0: i32, %arg1: i32, %arg2: memref<1x8x4x128xf32, #tpu.memory_space<vmem>>, %arg3: memref<8x128xf32, #tpu.memory_space<vmem>>, %arg4: memref<8x128xf32, #tpu.memory_space<vmem>>, %arg5: memref<1x8x4x128xf32, #tpu.memory_space<vmem>>) attributes {dimension_semantics = [#tpu.dimension_semantics<parallel>, #tpu.dimension_semantics<parallel>], iteration_bounds = array<i64: 1, 2>, scalar_prefetch = 0 : i64, scratch_operands = 0 : i64, tpu.core_type = #tpu.core_type<tc>, window_params = [{transform_indices = @transform_0, window_bounds = array<i64: 1, 8, 4, 128>}, {transform_indices = @transform_1, window_bounds = array<i64: 8, 128>}, {transform_indices = @transform_2, window_bounds = array<i64: 8, 128>}, {transform_indices = @transform_3, window_bounds = array<i64: 1, 8, 4, 128>}]} {
    %c0 = arith.constant 0 : index
    %c0_0 = arith.constant 0 : index
    %c0_1 = arith.constant 0 : index
    %c0_2 = arith.constant 0 : index
    %0 = vector.load %arg2[%c0, %c0_0, %c0_1, %c0_2] : memref<1x8x4x128xf32, #tpu.memory_space<vmem>>, vector<1x8x4x128xf32>
    %1 = vector.shape_cast %0 : vector<1x8x4x128xf32> to vector<8x4x128xf32>
    %2 = vector.extract_strided_slice %1 {offsets = [0, 0, 1], sizes = [8, 4, 127], strides = [1, 1, 1]} : vector<8x4x128xf32> to vector<8x4x127xf32>
    %3 = vector.extract_strided_slice %1 {offsets = [0, 0, 0], sizes = [8, 4, 1], strides = [1, 1, 1]} : vector<8x4x128xf32> to vector<8x4x1xf32>
    %4 = tpu.concatenate %2, %3 in 2 : vector<8x4x127xf32>, vector<8x4x1xf32> -> vector<8x4x128xf32>
    %5 = vector.extract_strided_slice %1 {offsets = [0, 0, 127], sizes = [8, 4, 1], strides = [1, 1, 1]} : vector<8x4x128xf32> to vector<8x4x1xf32>
    %6 = vector.extract_strided_slice %1 {offsets = [0, 0, 0], sizes = [8, 4, 127], strides = [1, 1, 1]} : vector<8x4x128xf32> to vector<8x4x127xf32>
    %7 = tpu.concatenate %5, %6 in 2 : vector<8x4x1xf32>, vector<8x4x127xf32> -> vector<8x4x128xf32>
    %8 = tpu.iota {dimensions = array<i32: 2>} : vector<8x4x128xi32>
    %c2_i32 = arith.constant 2 : i32
    %c0_i32 = arith.constant 0 : i32
    %9 = arith.cmpi eq, %c2_i32, %c0_i32 : i32
    %c1_i32 = arith.constant 1 : i32
    %10 = arith.select %9, %c1_i32, %c2_i32 : i32
    %11 = vector.broadcast %10 : i32 to vector<8x4x128xi32>
    %12 = arith.remsi %8, %11 : vector<8x4x128xi32>
    %c0_i32_3 = arith.constant 0 : i32
    %13 = vector.broadcast %c0_i32_3 : i32 to vector<8x4x128xi32>
    %14 = arith.cmpi ne, %12, %13 : vector<8x4x128xi32>
    %c0_i32_4 = arith.constant 0 : i32
    %15 = vector.broadcast %c0_i32_4 : i32 to vector<8x4x128xi32>
    %16 = arith.cmpi slt, %12, %15 : vector<8x4x128xi32>
    %c0_i32_5 = arith.constant 0 : i32
    %17 = arith.cmpi slt, %10, %c0_i32_5 : i32
    %18 = vector.broadcast %17 : i1 to vector<8x4x128xi1>
    %19 = vector.broadcast %18 : vector<8x4x128xi1> to vector<8x4x128xi1>
    %20 = arith.xori %16, %19 : vector<8x4x128xi1>
    %21 = arith.andi %20, %14 : vector<8x4x128xi1>
    %22 = vector.broadcast %10 : i32 to vector<8x4x128xi32>
    %23 = arith.addi %12, %22 : vector<8x4x128xi32>
    %24 = arith.select %21, %23, %12 : vector<8x4x128xi1>, vector<8x4x128xi32>
    %c0_i32_6 = arith.constant 0 : i32
    %25 = vector.broadcast %c0_i32_6 : i32 to vector<8x4x128xi32>
    %26 = arith.cmpi eq, %24, %25 : vector<8x4x128xi32>
    %27 = arith.select %26, %4, %7 : vector<8x4x128xi1>, vector<8x4x128xf32>
    %c0_7 = arith.constant 0 : index
    %c0_8 = arith.constant 0 : index
    %28 = vector.load %arg3[%c0_7, %c0_8] : memref<8x128xf32, #tpu.memory_space<vmem>>, vector<8x128xf32>
    %29 = vector.shape_cast %28 : vector<8x128xf32> to vector<8x1x128xf32>
    %c0_9 = arith.constant 0 : index
    %c0_10 = arith.constant 0 : index
    %30 = vector.load %arg4[%c0_9, %c0_10] : memref<8x128xf32, #tpu.memory_space<vmem>>, vector<8x128xf32>
    %31 = vector.shape_cast %30 : vector<8x128xf32> to vector<8x1x128xf32>
    %32 = vector.broadcast %29 : vector<8x1x128xf32> to vector<8x4x128xf32>
    %33 = arith.mulf %1, %32 : vector<8x4x128xf32>
    %34 = vector.broadcast %31 : vector<8x1x128xf32> to vector<8x4x128xf32>
    %35 = arith.mulf %27, %34 : vector<8x4x128xf32>
    %36 = arith.addf %33, %35 : vector<8x4x128xf32>
    %c0_11 = arith.constant 0 : index
    %c0_12 = arith.constant 0 : index
    %c0_13 = arith.constant 0 : index
    %c0_14 = arith.constant 0 : index
    %37 = vector.load %arg5[%c0_11, %c0_12, %c0_13, %c0_14] : memref<1x8x4x128xf32, #tpu.memory_space<vmem>>, vector<1x8x4x128xf32>
    %38 = vector.shape_cast %37 : vector<1x8x4x128xf32> to vector<8x4x128xf32>
    %39 = vector.shape_cast %36 : vector<8x4x128xf32> to vector<1x8x4x128xf32>
    tpu.vector_store %arg5[%c0_11, %c0_12, %c0_13, %c0_14], %39 {strides = array<i32>} : memref<1x8x4x128xf32, #tpu.memory_space<vmem>>, vector<1x8x4x128xf32>,
    return
  }
  func.func @transform_0(%arg0: i32, %arg1: i32) -> (i32, i32, i32, i32) {
    %c0_i32 = arith.constant 0 : i32
    %c0_i32_0 = arith.constant 0 : i32
    %c0_i32_1 = arith.constant 0 : i32
    return %arg1, %arg0, %c0_i32, %c0_i32_0 : i32, i32, i32, i32
  }
  func.func @transform_1(%arg0: i32, %arg1: i32) -> (i32, i32) {
    %c0_i32 = arith.constant 0 : i32
    %c0_i32_0 = arith.constant 0 : i32
    return %arg0, %c0_i32 : i32, i32
  }
  func.func @transform_2(%arg0: i32, %arg1: i32) -> (i32, i32) {
    %c0_i32 = arith.constant 0 : i32
    %c0_i32_0 = arith.constant 0 : i32
    return %arg0, %c0_i32 : i32, i32
  }
  func.func @transform_3(%arg0: i32, %arg1: i32) -> (i32, i32, i32, i32) {
    %c0_i32 = arith.constant 0 : i32
    %c0_i32_0 = arith.constant 0 : i32
    %c0_i32_1 = arith.constant 0 : i32
    return %arg1, %arg0, %c0_i32, %c0_i32_0 : i32, i32, i32, i32
  }
}

</mosaic_0001>

<llo_original>
// kernel: tpu_custom_call.1
$region0: #{tpu_custom_call.1}
  #allocation0 [shape = 'u32[]', space=smem, size = 0x4, offset = 0x4, fixed_abs, tag = 'smem constant byte address 0x4 - core index']
  #allocation1 [shape = 'u32[144,128]{1,0:T(1,128)}', space=vmem, size = 0x12000, scoped, tag = 'internal scratch']
  %s0 = inlined_call_operand.hbm [shape: f32[2,8,4,128], index: 0, kind: input, shape index: {}]
  %s1 = inlined_call_operand.hbm [shape: f32[8,128], index: 1, kind: input, shape index: {}]
  %s2 = inlined_call_operand.hbm [shape: f32[8,128], index: 2, kind: input, shape index: {}]
  %s3 = inlined_call_operand.hbm [shape: f32[2,8,4,128], index: 3, kind: output, shape index: {}]
  %s4 = sld [smem:[#allocation0]]
  $region57: #{tpu_custom_call.1} parent=0
    _
  %s6 = ssub.s32 1, %s4
  %s7 = scalar_select 0, %s6, %s4
  $region1: #{tpu_custom_call.1} parent=0
    #allocation2 [shape = 'u8[32768]{0}', space=vmem, size = 0x8000, scoped, tag = 'input window, operand 0']
    #allocation3 [shape = 's32[2]{0}', space=sflag, size = 0x8, scoped, tag = 'scoped memory for tpu_custom_call.1']
    #allocation4 [shape = 's32[2]{0}', space=sflag, size = 0x8, scoped, tag = 'scoped memory for tpu_custom_call.1']
    #allocation5 [shape = 'u8[4096]{0}', space=vmem, size = 0x1000, scoped, tag = 'input window, operand 1, single buffered']
    #allocation6 [shape = 's32[1]{0}', space=sflag, size = 0x4, scoped, tag = 'scoped memory for tpu_custom_call.1']
    #allocation7 [shape = 'u8[4096]{0}', space=vmem, size = 0x1000, scoped, tag = 'input window, operand 2, single buffered']
    #allocation8 [shape = 'u8[32768]{0}', space=vmem, size = 0x8000, scoped, tag = 'output window, operand 0']
    %8 = vsyncpa [#allocation3], 0
    %s9 = scalar_lea.sflag [#allocation3], 1
    %10 = vsyncpa %s9, 0
    %11 = vsyncpa [#allocation6], 0
    %12 = vsyncpa [#allocation4], 0
    %s13 = scalar_lea.sflag [#allocation4], 1
    %14 = vsyncpa %s13, 0
    loop: start=0, step=1, limit=4
    $region2: #{tpu_custom_call.1} parent=1 // loop_pre_header
      _
    $region3: #{tpu_custom_call.1} parent=1 // loop_header
      %s16 = sphi 0, %s20
      %p17 = scmp.ge.s32.totalorder %s16, 4
      %s23 = sphi 0, %s35
      %s24 = sphi 0, %s31
      %s25 = sphi 0, %s23
      %s26 = sphi 0, %s24
      %s27 = sphi 0, %s25
      %s28 = sphi 0, %s26
      %s40 = sphi 0, %s42
      %s43 = sphi 0, %s40
      %s44 = sphi 0, %s43
      %s60 = sphi 0, %s44
      %s66 = sphi 0, %s68
      %s69 = sphi 0, %s66
      %s70 = sphi 0, %s69
      %s86 = sphi 0, %s70
      %s92 = sphi 0, %s94
      %s95 = sphi 0, %s92
      %s96 = sphi 0, %s95
      %s112 = sphi 0, %s96
      %s120 = sphi 0, %s122
      %s123 = sphi 0, %s120
      %s124 = sphi 0, %s123
      %s140 = sphi 0, %s124
    $region4: #{tpu_custom_call.1} parent=1 // loop_header_branch
      %19 = sbr.rel (%p17) target = $region8
    $region5: #{tpu_custom_call.1} parent=1 // loop_body
      %s21 = ssub.s32 %s16, 1
      %s22 = ssub.s32 %s16, 2
      %s29 = sadd.s32 1, %s24
      %p30 = scmp.ge.s32.totalorder %s29, 2
      %s31 = scalar_select %p30, 0, %s29
      %s32 = sadd.s32 1, %s23
      %s33 = scalar_select %p30, %s32, %s23
      %p34 = scmp.ge.s32.totalorder %s33, 1
      %s35 = scalar_select %p34, 0, %s33
      %s36 = ssub.s32 %s24, %s31
      %s37 = ssub.s32 %s23, %s35
      %s38 = sor.u32 %s36, %s37
      %p39 = scmp.eq.s32.totalorder %s38, 0
      %s41 = sadd.s32 %s40, 1
      %s42 = scalar_select %p39, %s40, %s41
      %p45 = pneg %p39
      %p46 = scmp.eq.s32.totalorder %s16, 1
      %p47 = por %p45, %p46
      %p48 = scmp.ne.s32.totalorder %s40, %s43
      %p49 = scmp.eq.s32.totalorder %s16, 0
      %p50 = por %p48, %p49
      %p51 = scmp.ne.s32.totalorder %s40, %s43
      %p52 = scmp.eq.s32.totalorder %s21, 1
      %p53 = por %p51, %p52
      %p54 = scmp.ne.s32.totalorder %s43, %s44
      %p55 = scmp.eq.s32.totalorder %s21, 0
      %p56 = por %p54, %p55
      %p57 = scmp.ne.s32.totalorder %s43, %s44
      %p58 = scmp.eq.s32.totalorder %s22, 1
      %p59 = por %p57, %p58
      %p61 = scmp.ne.s32.totalorder %s44, %s60
      %p62 = scmp.eq.s32.totalorder %s22, 0
      %p63 = por %p61, %p62
      %s64 = ssub.s32 %s23, %s35
      %p65 = scmp.eq.s32.totalorder %s64, 0
      %s67 = sadd.s32 %s66, 1
      %s68 = scalar_select %p65, %s66, %s67
      %p71 = pneg %p65
      %p72 = scmp.eq.s32.totalorder %s16, 1
      %p73 = por %p71, %p72
      %p74 = scmp.ne.s32.totalorder %s66, %s69
      %p75 = scmp.eq.s32.totalorder %s16, 0
      %p76 = por %p74, %p75
      %p77 = scmp.ne.s32.totalorder %s66, %s69
      %p78 = scmp.eq.s32.totalorder %s21, 1
      %p79 = por %p77, %p78
      %p80 = scmp.ne.s32.totalorder %s69, %s70
      %p81 = scmp.eq.s32.totalorder %s21, 0
      %p82 = por %p80, %p81
      %p83 = scmp.ne.s32.totalorder %s69, %s70
      %p84 = scmp.eq.s32.totalorder %s22, 1
      %p85 = por %p83, %p84
      %p87 = scmp.ne.s32.totalorder %s70, %s86
      %p88 = scmp.eq.s32.totalorder %s22, 0
      %p89 = por %p87, %p88
      %s90 = ssub.s32 %s23, %s35
      %p91 = scmp.eq.s32.totalorder %s90, 0
      %s93 = sadd.s32 %s92, 1
      %s94 = scalar_select %p91, %s92, %s93
      %p97 = pneg %p91
      %p98 = scmp.eq.s32.totalorder %s16, 1
      %p99 = por %p97, %p98
      %p100 = scmp.ne.s32.totalorder %s92, %s95
      %p101 = scmp.eq.s32.totalorder %s16, 0
      %p102 = por %p100, %p101
      %p103 = scmp.ne.s32.totalorder %s92, %s95
      %p104 = scmp.eq.s32.totalorder %s21, 1
      %p105 = por %p103, %p104
      %p106 = scmp.ne.s32.totalorder %s95, %s96
      %p107 = scmp.eq.s32.totalorder %s21, 0
      %p108 = por %p106, %p107
      %p109 = scmp.ne.s32.totalorder %s95, %s96
      %p110 = scmp.eq.s32.totalorder %s22, 1
      %p111 = por %p109, %p110
      %p113 = scmp.ne.s32.totalorder %s96, %s112
      %p114 = scmp.eq.s32.totalorder %s22, 0
      %p115 = por %p113, %p114
      %s116 = ssub.s32 %s24, %s31
      %s117 = ssub.s32 %s23, %s35
      %s118 = sor.u32 %s116, %s117
      %p119 = scmp.eq.s32.totalorder %s118, 0
      %s121 = sadd.s32 %s120, 1
      %s122 = scalar_select %p119, %s120, %s121
      %p125 = pneg %p119
      %p126 = scmp.eq.s32.totalorder %s16, 1
      %p127 = por %p125, %p126
      %p128 = scmp.ne.s32.totalorder %s120, %s123
      %p129 = scmp.eq.s32.totalorder %s16, 0
      %p130 = por %p128, %p129
      %p131 = scmp.ne.s32.totalorder %s120, %s123
      %p132 = scmp.eq.s32.totalorder %s21, 1
      %p133 = por %p131, %p132
      %p134 = scmp.ne.s32.totalorder %s123, %s124
      %p135 = scmp.eq.s32.totalorder %s21, 0
      %p136 = por %p134, %p135
      %p137 = scmp.ne.s32.totalorder %s123, %s124
      %p138 = scmp.eq.s32.totalorder %s22, 1
      %p139 = por %p137, %p138
      %p141 = scmp.ne.s32.totalorder %s124, %s140
      %p142 = scmp.eq.s32.totalorder %s22, 0
      %p143 = por %p141, %p142
      %p144 = scmp.le.s32.totalorder 1, %s16
      %p145 = scmp.lt.s32.totalorder %s16, 3
      %p146 = pnand %p144, %p145
      %p147 = pneg %p146
      // Predicated region
      $region9: #{tpu_custom_call.1} parent=5 // pred_check
        _
      $region10: #{tpu_custom_call.1} parent=5 // pred_check_branch
        %149 = sbr.rel (%p146) target = $region12
      $region11: #{tpu_custom_call.1} parent=5 // pred_region
        %s150 = ssub.s32 %s16, 1
        // Predicated region
        $region13: #{tpu_custom_call.1} parent=11 // pred_check
          %p151 = pneg %p82
        $region14: #{tpu_custom_call.1} parent=11 // pred_check_branch
          %153 = sbr.rel (%p151) target = $region16
        $region15: #{tpu_custom_call.1} parent=11 // pred_region
          %s155 = ssub.s32 128, 128
          %156 = vsyncadd [#allocation6], %s155
          %s157 = smul.addr %s25, 128
          %s158 = scalar_lea.hbm %s1, %s157
          %s160 = sshll.u32 [#allocation5], 4
          %s161 = int_to_ptr.vmem [resolvable:$true] %s160
          %163 = dma.hbm_to_vmem [thread:$0]  %s158, 128, %s161, [#allocation6]
        $region16: #{tpu_custom_call.1} parent=11 // pred_fallthru
          _
        // Predicated region
        $region17: #{tpu_custom_call.1} parent=11 // pred_check
          %p164 = pneg %p108
        $region18: #{tpu_custom_call.1} parent=11 // pred_check_branch
          %166 = sbr.rel (%p164) target = $region20
        $region19: #{tpu_custom_call.1} parent=11 // pred_region
          %s168 = ssub.s32 128, 128
          %169 = vsyncadd [#allocation6], %s168
          %s170 = smul.addr %s25, 128
          %s171 = scalar_lea.hbm %s2, %s170
          %s173 = sshll.u32 [#allocation7], 4
          %s174 = int_to_ptr.vmem [resolvable:$true] %s173
          %176 = dma.hbm_to_vmem [thread:$0]  %s171, 128, %s174, [#allocation6]
        $region20: #{tpu_custom_call.1} parent=11 // pred_fallthru
          _
      $region12: #{tpu_custom_call.1} parent=5 // pred_fallthru
        _
      %p177 = scmp.lt.s32.totalorder %s16, 2
      // Predicated region
      $region21: #{tpu_custom_call.1} parent=5 // pred_check
        %p178 = pneg %p177
      $region22: #{tpu_custom_call.1} parent=5 // pred_check_branch
        %180 = sbr.rel (%p178) target = $region24
      $region23: #{tpu_custom_call.1} parent=5 // pred_region
        // Predicated region
        $region25: #{tpu_custom_call.1} parent=23 // pred_check
          %p181 = pneg %p50
        $region26: #{tpu_custom_call.1} parent=23 // pred_check_branch
          %183 = sbr.rel (%p181) target = $region28
        $region27: #{tpu_custom_call.1} parent=23 // pred_region
          %s184 = sand.u32 %s40, 1
          %s185 = scalar_lea.sflag [#allocation3], %s184
          %s186 = sand.u32 %s40, 1
          %s187 = smul.addr %s186, 32
          %s188 = scalar_lea.vmem [#allocation2], %s187
          %s189 = smul.u32 8, %s23
          %s191 = ssub.s32 512, 512
          %192 = vsyncadd %s185, %s191
          %s193 = smul.addr %s24, 8
          %s194 = sadd.s32 %s189, %s193
          %s195 = smul.addr %s194, 64
          %s196 = scalar_lea.hbm %s0, %s195
          %s197 = sshll.u32 %s188, 4
          %s198 = int_to_ptr.vmem [resolvable:$true] %s197
          %203 = dma.hbm_to_vmem [thread:$0]  %s196, 512, %s198, %s185, 64, 64, 4
        $region28: #{tpu_custom_call.1} parent=23 // pred_fallthru
          _
      $region24: #{tpu_custom_call.1} parent=5 // pred_fallthru
        _
      %p204 = scmp.le.s32.totalorder 1, %s16
      %p205 = scmp.lt.s32.totalorder %s16, 3
      %p206 = pnand %p204, %p205
      %p207 = pneg %p206
      // Predicated region
      $region29: #{tpu_custom_call.1} parent=5 // pred_check
        _
      $region30: #{tpu_custom_call.1} parent=5 // pred_check_branch
        %209 = sbr.rel (%p206) target = $region32
      $region31: #{tpu_custom_call.1} parent=5 // pred_region
        %s210 = ssub.s32 %s16, 1
        %s211 = sand.u32 %s43, 1
        %s212 = scalar_lea.sflag [#allocation3], %s211
        %s213 = sand.u32 %s43, 1
        %s214 = smul.addr %s213, 32
        %s215 = scalar_lea.vmem [#allocation2], %s214
        // Predicated region
        $region33: #{tpu_custom_call.1} parent=31 // pred_check
          %p216 = pneg %p56
        $region34: #{tpu_custom_call.1} parent=31 // pred_check_branch
          %218 = sbr.rel (%p216) target = $region36
        $region35: #{tpu_custom_call.1} parent=31 // pred_region
          %219 = dma.done %s212, 512
        $region36: #{tpu_custom_call.1} parent=31 // pred_fallthru
          _
        // Predicated region
        $region37: #{tpu_custom_call.1} parent=31 // pred_check
          %p220 = pneg %p82
        $region38: #{tpu_custom_call.1} parent=31 // pred_check_branch
          %222 = sbr.rel (%p220) target = $region40
        $region39: #{tpu_custom_call.1} parent=31 // pred_region
          %223 = dma.done [#allocation6], 128
        $region40: #{tpu_custom_call.1} parent=31 // pred_fallthru
          _
        // Predicated region
        $region41: #{tpu_custom_call.1} parent=31 // pred_check
          %p224 = pneg %p108
        $region42: #{tpu_custom_call.1} parent=31 // pred_check_branch
          %226 = sbr.rel (%p224) target = $region44
        $region43: #{tpu_custom_call.1} parent=31 // pred_region
          %227 = dma.done [#allocation6], 128
        $region44: #{tpu_custom_call.1} parent=31 // pred_fallthru
          _
        %s228 = sand.u32 %s43, 1
        %s229 = scalar_lea.sflag [#allocation3], %s228
        %s230 = sand.u32 %s43, 1
        %s231 = smul.addr %s230, 32
        %s232 = scalar_lea.vmem [#allocation2], %s231
        %p233 = pneg %p56
        %p234 = pneg %p53
        %p235 = pneg %p82
        %p236 = pneg %p79
        %p237 = pneg %p108
        %p238 = pneg %p105
        %p239 = pneg %p136
        %p240 = pneg %p133
        %s241 = sand.u32 %s123, 1
        %s242 = scalar_lea.sflag [#allocation4], %s241
        %s243 = sand.u32 %s123, 1
        %s244 = smul.addr %s243, 32
        %s245 = scalar_lea.vmem [#allocation8], %s244
        %s246 = smul.u32 8, %s25
        %s247 = smul.u32 8, %s25
        %v248 = vld [vmem:[%s215] sm:$0xf]
        %v249 = vld [vmem:[%s215 + $0x4] sm:$0xf]
        %v250 = vld [vmem:[%s215 + $0x8] sm:$0xf]
        %v251 = vld [vmem:[%s215 + $0xc] sm:$0xf]
        %v252 = vld [vmem:[%s215 + $0x10] sm:$0xf]
        %v253 = vld [vmem:[%s215 + $0x14] sm:$0xf]
        %v254 = vld [vmem:[%s215 + $0x18] sm:$0xf]
        %v255 = vld [vmem:[%s215 + $0x1c] sm:$0xf]
        %264 = vrot.lane.b32.xlu0 %v248, 127
        %v265 = vpop.permute.xlu0 %264
        %266 = vrot.lane.b32.xlu0 %v249, 127
        %v267 = vpop.permute.xlu0 %266
        %268 = vrot.lane.b32.xlu0 %v250, 127
        %v269 = vpop.permute.xlu0 %268
        %270 = vrot.lane.b32.xlu0 %v251, 127
        %v271 = vpop.permute.xlu0 %270
        %272 = vrot.lane.b32.xlu0 %v252, 127
        %v273 = vpop.permute.xlu0 %272
        %274 = vrot.lane.b32.xlu0 %v253, 127
        %v275 = vpop.permute.xlu0 %274
        %276 = vrot.lane.b32.xlu0 %v254, 127
        %v277 = vpop.permute.xlu0 %276
        %278 = vrot.lane.b32.xlu0 %v255, 127
        %v279 = vpop.permute.xlu0 %278
        %288 = vrot.lane.b32.xlu0 %v248, 1
        %v289 = vpop.permute.xlu0 %288
        %290 = vrot.lane.b32.xlu0 %v249, 1
        %v291 = vpop.permute.xlu0 %290
        %292 = vrot.lane.b32.xlu0 %v250, 1
        %v293 = vpop.permute.xlu0 %292
        %294 = vrot.lane.b32.xlu0 %v251, 1
        %v295 = vpop.permute.xlu0 %294
        %296 = vrot.lane.b32.xlu0 %v252, 1
        %v297 = vpop.permute.xlu0 %296
        %298 = vrot.lane.b32.xlu0 %v253, 1
        %v299 = vpop.permute.xlu0 %298
        %300 = vrot.lane.b32.xlu0 %v254, 1
        %v301 = vpop.permute.xlu0 %300
        %302 = vrot.lane.b32.xlu0 %v255, 1
        %v303 = vpop.permute.xlu0 %302
        %v312 = vlaneseq
        %v313 = vand.u32 %v312, 127
        %vm314 = vcmp.lt.s32.totalorder %v313, 0
        %v315 = vsub.s32 0, %v313
        %v316 = vsel %vm314, %v315, %v313
        %v317 = vshrl.u32 %v316, 1
        %v318 = vand.u32 %v316, 1
        %v319 = vsub.s32 0, %v318
        %v320 = vsel %vm314, %v319, %v318
        %vm321 = vcmp.ne.s32.totalorder %v320, 0
        %vm322 = vcmp.lt.s32.totalorder %v320, 0
        %vm323 = vmand %vm322, %vm321
        %v324 = vadd.s32 %v320, 2
        %v325 = vsel %vm323, %v324, %v320
        %vm326 = vcmp.eq.s32.totalorder %v325, 0
        %v327 = vsel %vm326, %v265, %v289
        %v328 = vsel %vm326, %v267, %v291
        %v329 = vsel %vm326, %v269, %v293
        %v330 = vsel %vm326, %v271, %v295
        %v331 = vsel %vm326, %v273, %v297
        %v332 = vsel %vm326, %v275, %v299
        %v333 = vsel %vm326, %v277, %v301
        %v334 = vsel %vm326, %v279, %v303
        %v335 = vld [vmem:[#allocation5] sm:$0xff]
        %v337 = vcombine.high %v335, %v335
        %v339 = vunpack.c.l.s4 1966171168
        %v340 = vunpack.c.0.s8 %v339
        %v341 = vlaneseq
        %v342 = vshrl.u32 %v341, 7
        %v343 = vsub.s32 %v340, %v342
        %v344 = vrot.slane %v335, %v343
        %v346 = vunpack.c.l.s4 1966171168
        %v347 = vunpack.c.0.s8 %v346
        %v348 = vlaneseq
        %v349 = vshrl.u32 %v348, 7
        %v350 = vsub.s32 %v347, %v349
        %v351 = vrot.slane %v337, %v350
        %v352 = vcombine.high %v344, %v344
        %v353 = vcombine.high %v351, %v351
        %v355 = vunpack.c.l.s4 1966171168
        %v356 = vunpack.c.0.s8 %v355
        %v357 = vlaneseq
        %v358 = vshrl.u32 %v357, 7
        %v359 = vsub.s32 %v356, %v358
        %v360 = vrot.slane %v344, %v359
        %v362 = vunpack.c.l.s4 1966171168
        %v363 = vunpack.c.0.s8 %v362
        %v364 = vlaneseq
        %v365 = vshrl.u32 %v364, 7
        %v366 = vsub.s32 %v363, %v365
        %v367 = vrot.slane %v351, %v366
        %v369 = vunpack.c.l.s4 1966171168
        %v370 = vunpack.c.0.s8 %v369
        %v371 = vlaneseq
        %v372 = vshrl.u32 %v371, 7
        %v373 = vsub.s32 %v370, %v372
        %v374 = vrot.slane %v352, %v373
        %v376 = vunpack.c.l.s4 1966171168
        %v377 = vunpack.c.0.s8 %v376
        %v378 = vlaneseq
        %v379 = vshrl.u32 %v378, 7
        %v380 = vsub.s32 %v377, %v379
        %v381 = vrot.slane %v353, %v380
        %v382 = vcombine.high %v360, %v360
        %v383 = vcombine.high %v367, %v367
        %v384 = vcombine.high %v374, %v374
        %v385 = vcombine.high %v381, %v381
        %v386 = vld [vmem:[#allocation7] sm:$0xff]
        %v388 = vcombine.high %v386, %v386
        %v390 = vunpack.c.l.s4 1966171168
        %v391 = vunpack.c.0.s8 %v390
        %v392 = vlaneseq
        %v393 = vshrl.u32 %v392, 7
        %v394 = vsub.s32 %v391, %v393
        %v395 = vrot.slane %v386, %v394
        %v397 = vunpack.c.l.s4 1966171168
        %v398 = vunpack.c.0.s8 %v397
        %v399 = vlaneseq
        %v400 = vshrl.u32 %v399, 7
        %v401 = vsub.s32 %v398, %v400
        %v402 = vrot.slane %v388, %v401
        %v403 = vcombine.high %v395, %v395
        %v404 = vcombine.high %v402, %v402
        %v406 = vunpack.c.l.s4 1966171168
        %v407 = vunpack.c.0.s8 %v406
        %v408 = vlaneseq
        %v409 = vshrl.u32 %v408, 7
        %v410 = vsub.s32 %v407, %v409
        %v411 = vrot.slane %v395, %v410
        %v413 = vunpack.c.l.s4 1966171168
        %v414 = vunpack.c.0.s8 %v413
        %v415 = vlaneseq
        %v416 = vshrl.u32 %v415, 7
        %v417 = vsub.s32 %v414, %v416
        %v418 = vrot.slane %v402, %v417
        %v420 = vunpack.c.l.s4 1966171168
        %v421 = vunpack.c.0.s8 %v420
        %v422 = vlaneseq
        %v423 = vshrl.u32 %v422, 7
        %v424 = vsub.s32 %v421, %v423
        %v425 = vrot.slane %v403, %v424
        %v427 = vunpack.c.l.s4 1966171168
        %v428 = vunpack.c.0.s8 %v427
        %v429 = vlaneseq
        %v430 = vshrl.u32 %v429, 7
        %v431 = vsub.s32 %v428, %v430
        %v432 = vrot.slane %v404, %v431
        %v433 = vcombine.high %v411, %v411
        %v434 = vcombine.high %v418, %v418
        %v435 = vcombine.high %v425, %v425
        %v436 = vcombine.high %v432, %v432
        %v437 = vlaneseq
        %v438 = vshrl.u32 %v437, 7
        %v439 = vsub.s32 0, %v438
        %v440 = vrot.slane %v360, %v439
        %v441 = vlaneseq
        %v442 = vshrl.u32 %v441, 7
        %v443 = vsub.s32 0, %v442
        %v444 = vrot.slane %v374, %v443
        %v445 = vlaneseq
        %v446 = vshrl.u32 %v445, 7
        %v447 = vsub.s32 0, %v446
        %v448 = vrot.slane %v382, %v447
        %v449 = vlaneseq
        %v450 = vshrl.u32 %v449, 7
        %v451 = vsub.s32 0, %v450
        %v452 = vrot.slane %v384, %v451
        %v453 = vlaneseq
        %v454 = vshrl.u32 %v453, 7
        %v455 = vsub.s32 0, %v454
        %v456 = vrot.slane %v367, %v455
        %v457 = vlaneseq
        %v458 = vshrl.u32 %v457, 7
        %v459 = vsub.s32 0, %v458
        %v460 = vrot.slane %v381, %v459
        %v461 = vlaneseq
        %v462 = vshrl.u32 %v461, 7
        %v463 = vsub.s32 0, %v462
        %v464 = vrot.slane %v383, %v463
        %v465 = vlaneseq
        %v466 = vshrl.u32 %v465, 7
        %v467 = vsub.s32 0, %v466
        %v468 = vrot.slane %v385, %v467
        %v477 = vmul.f32 %v248, %v440
        %v478 = vmul.f32 %v249, %v444
        %v479 = vmul.f32 %v250, %v448
        %v480 = vmul.f32 %v251, %v452
        %v481 = vmul.f32 %v252, %v456
        %v482 = vmul.f32 %v253, %v460
        %v483 = vmul.f32 %v254, %v464
        %v484 = vmul.f32 %v255, %v468
        %v485 = vlaneseq
        %v486 = vshrl.u32 %v485, 7
        %v487 = vsub.s32 0, %v486
        %v488 = vrot.slane %v411, %v487
        %v489 = vlaneseq
        %v490 = vshrl.u32 %v489, 7
        %v491 = vsub.s32 0, %v490
        %v492 = vrot.slane %v425, %v491
        %v493 = vlaneseq
        %v494 = vshrl.u32 %v493, 7
        %v495 = vsub.s32 0, %v494
        %v496 = vrot.slane %v433, %v495
        %v497 = vlaneseq
        %v498 = vshrl.u32 %v497, 7
        %v499 = vsub.s32 0, %v498
        %v500 = vrot.slane %v435, %v499
        %v501 = vlaneseq
        %v502 = vshrl.u32 %v501, 7
        %v503 = vsub.s32 0, %v502
        %v504 = vrot.slane %v418, %v503
        %v505 = vlaneseq
        %v506 = vshrl.u32 %v505, 7
        %v507 = vsub.s32 0, %v506
        %v508 = vrot.slane %v432, %v507
        %v509 = vlaneseq
        %v510 = vshrl.u32 %v509, 7
        %v511 = vsub.s32 0, %v510
        %v512 = vrot.slane %v434, %v511
        %v513 = vlaneseq
        %v514 = vshrl.u32 %v513, 7
        %v515 = vsub.s32 0, %v514
        %v516 = vrot.slane %v436, %v515
        %v525 = vmul.f32 %v327, %v488
        %v526 = vmul.f32 %v328, %v492
        %v527 = vmul.f32 %v329, %v496
        %v528 = vmul.f32 %v330, %v500
        %v529 = vmul.f32 %v331, %v504
        %v530 = vmul.f32 %v332, %v508
        %v531 = vmul.f32 %v333, %v512
        %v532 = vmul.f32 %v334, %v516
        %v533 = vadd.f32 %v477, %v525
        %v534 = vadd.f32 %v478, %v526
        %v535 = vadd.f32 %v479, %v527
        %v536 = vadd.f32 %v480, %v528
        %v537 = vadd.f32 %v481, %v529
        %v538 = vadd.f32 %v482, %v530
        %v539 = vadd.f32 %v483, %v531
        %v540 = vadd.f32 %v484, %v532
        %541 = vst [vmem:[%s245] sm:$0xf] %v533
        %542 = vst [vmem:[%s245 + $0x4] sm:$0xf] %v534
        %543 = vst [vmem:[%s245 + $0x8] sm:$0xf] %v535
        %544 = vst [vmem:[%s245 + $0xc] sm:$0xf] %v536
        %545 = vst [vmem:[%s245 + $0x10] sm:$0xf] %v537
        %546 = vst [vmem:[%s245 + $0x14] sm:$0xf] %v538
        %547 = vst [vmem:[%s245 + $0x18] sm:$0xf] %v539
        %548 = vst [vmem:[%s245 + $0x1c] sm:$0xf] %v540
        %s549 = sand.u32 %s123, 1
        %s550 = scalar_lea.sflag [#allocation4], %s549
        %s551 = sand.u32 %s123, 1
        %s552 = smul.addr %s551, 32
        %s553 = scalar_lea.vmem [#allocation8], %s552
        // Predicated region
        $region45: #{tpu_custom_call.1} parent=31 // pred_check
          %p554 = pneg %p133
        $region46: #{tpu_custom_call.1} parent=31 // pred_check_branch
          %556 = sbr.rel (%p554) target = $region48
        $region47: #{tpu_custom_call.1} parent=31 // pred_region
          %s557 = smul.u32 8, %s25
          %s559 = ssub.s32 512, 512
          %560 = vsyncadd %s550, %s559
          %s561 = smul.addr %s26, 8
          %s562 = sadd.s32 %s557, %s561
          %s563 = smul.addr %s562, 64
          %s564 = scalar_lea.hbm %s3, %s563
          %s565 = sshll.u32 %s553, 4
          %s566 = int_to_ptr.vmem [resolvable:$true] %s565
          %571 = dma.vmem_to_hbm [thread:$0]  %s566, 512, %s564, %s550, 64, 64, 4
        $region48: #{tpu_custom_call.1} parent=31 // pred_fallthru
          _
      $region32: #{tpu_custom_call.1} parent=5 // pred_fallthru
        _
      %p572 = scmp.le.s32.totalorder 2, %s16
      // Predicated region
      $region49: #{tpu_custom_call.1} parent=5 // pred_check
        %p573 = pneg %p572
      $region50: #{tpu_custom_call.1} parent=5 // pred_check_branch
        %575 = sbr.rel (%p573) target = $region52
      $region51: #{tpu_custom_call.1} parent=5 // pred_region
        %s576 = ssub.s32 %s16, 2
        // Predicated region
        $region53: #{tpu_custom_call.1} parent=51 // pred_check
          %p577 = pneg %p139
        $region54: #{tpu_custom_call.1} parent=51 // pred_check_branch
          %579 = sbr.rel (%p577) target = $region56
        $region55: #{tpu_custom_call.1} parent=51 // pred_region
          %s580 = sand.u32 %s124, 1
          %s581 = scalar_lea.sflag [#allocation4], %s580
          %s582 = sand.u32 %s124, 1
          %s583 = smul.addr %s582, 32
          %s584 = scalar_lea.vmem [#allocation8], %s583
          %585 = dma.done %s581, 512
        $region56: #{tpu_custom_call.1} parent=51 // pred_fallthru
          _
      $region52: #{tpu_custom_call.1} parent=5 // pred_fallthru
        _
    $region6: #{tpu_custom_call.1} parent=1 // loop_footer
      %s20 = sadd.s32 1, %s16
    $region7: #{tpu_custom_call.1} parent=1 // loop_footer_branch
      %15 = sbr.rel target = $region3
    $region8: #{tpu_custom_call.1} parent=1 // loop_exit
      _
    %586 = vsyncpa [#allocation3], 1
    %s587 = scalar_lea.sflag [#allocation3], 1
    %588 = vsyncpa %s587, 1
    %589 = vsyncpa [#allocation6], 1
    %590 = vsyncpa [#allocation4], 1
    %s591 = scalar_lea.sflag [#allocation4], 1
    %592 = vsyncpa %s591, 1

</llo_original>
